<compile_context>
chip_gen: v7x
topology: tpu7x:2x2x1
jax: 0.10.0
libtpu: 0.0.40
codegen_flags: <defaults>
</compile_context>

<pallas_src>
import functools

import jax
import jax.numpy as jnp
from jax import lax
from jax.experimental import pallas as pl
from jax.experimental.pallas import tpu as pltpu

EPS = 1e-5
_VMEM_LIMIT = 32 * 1024 * 1024   # conservative: fits v7x's 64 MiB with headroom
_MAX_ROW_TILE = 32               # bound per-tile pixel slab


def _pick_row_tile(h, w, max_pixels):
    """Largest divisor R of h with R*w <= max_pixels (and R <= _MAX_ROW_TILE)."""
    best = 1
    for r in range(1, h + 1):
        if h % r == 0 and r <= _MAX_ROW_TILE and r * w <= max_pixels:
            best = r
    return best


def _group_rows(x, r, pad_mode):
    """(N, C, H, W) -> (N*G, C, r+2, W+2) overlapping row groups (1-px halo)."""
    n, c, h, w = x.shape
    xp = jnp.pad(x, ((0, 0), (0, 0), (1, 1), (1, 1)), mode=pad_mode)
    g = h // r
    idx = jnp.arange(g)[:, None] * r + jnp.arange(r + 2)[None, :]   # (G, r+2)
    xg = xp[:, :, idx, :]                                           # (N, C, G, r+2, W+2)
    xg = jnp.transpose(xg, (0, 2, 1, 3, 4))                         # (N, G, C, r+2, W+2)
    return xg.reshape(n * g, c, r + 2, w + 2)


def _ungroup_rows(y_flat, n, g, r, w):
    """(N*G, C, r*W) -> (N, C, H, W)."""
    c = y_flat.shape[1]
    y = y_flat.reshape(n, g, c, r, w)
    return jnp.transpose(y, (0, 2, 1, 3, 4)).reshape(n, c, g * r, w)


# ---------------------------------------------------------------------------
# Phase 1: 3x3 conv + bias + ReLU, plus per-tile per-channel sum / sum-of-sq.
# Accepts a variable number of input tensors (channel-concat is virtual: the
# weight is pre-split per input in the wrapper).
# ---------------------------------------------------------------------------
def _conv3x3_relu_stats_kernel(*refs, rows, width, n_in):
    # refs = (x_ref_0..x_ref_{n_in-1}, w_ref, b_ref, y_ref, st_ref)
    #   x_ref_k: (1, C_k, rows+2, width+2)  bf16  halo'd input row-group
    #   w_ref:   (C_out, 9*sum(C_k))        bf16  K ordered (input, ky, kx, c_in)
    #   b_ref:   (C_out, 1)                 f32
    #   y_ref:   (1, C_out, rows*width)     f32   pre-BN activation (lane-dense)
    #   st_ref:  (1, C_out, 2)              f32   per-tile (sum, sum of squares)
    x_refs = refs[:n_in]
    w_ref, b_ref = refs[n_in], refs[n_in + 1]
    y_ref, st_ref = refs[n_in + 2], refs[n_in + 3]

    taps = []
    for x_ref in x_refs:
        c_in = x_ref.shape[1]
        x = x_ref[0]                                     # (C_k, rows+2, width+2)
        for ky in range(3):
            for kx in range(3):
                taps.append(x[:, ky:ky + rows, kx:kx + width]
                            .reshape(c_in, rows * width))
    rhs = jnp.concatenate(taps, axis=0) if len(taps) > 1 else taps[0]
    # Single MXU matmul per tile, f32 accumulation.
    acc = jnp.dot(w_ref[...], rhs, preferred_element_type=jnp.float32)
    act = jnp.maximum(acc + b_ref[...], 0.0)             # (C_out, rows*width)
    y_ref[0] = act
    st_ref[0, :, 0:1] = jnp.sum(act, axis=1, keepdims=True)
    st_ref[0, :, 1:2] = jnp.sum(act * act, axis=1, keepdims=True)


# ---------------------------------------------------------------------------
# Phase 2: apply finalized BN affine (y * scale + shift), lane-dense.
# ---------------------------------------------------------------------------
def _bn_apply_kernel(y_ref, scale_ref, shift_ref, o_ref):
    o_ref[...] = (y_ref[...] * scale_ref[...] + shift_ref[...]).astype(o_ref.dtype)


def conv3x3_relu_bn(xs, wt, b, gamma, beta, *, max_tile_pixels=4096):
    """Conv2d(3x3, pad=1) -> ReLU -> BatchNorm2d (training-mode batch stats).

    `xs` may be a single (N,C,H,W) array or a list of arrays that are treated
    as channel-concatenated (the concat is never materialized).
    """
    if not isinstance(xs, (list, tuple)):
        xs = [xs]
    n, _, h, w = xs[0].shape
    c_ins = [int(x.shape[1]) for x in xs]
    c_out = wt.shape[0]
    r = _pick_row_tile(h, w, max_tile_pixels)
    g = h // r
    ng = n * g

    xgs = [_group_rows(x, r, "constant").astype(jnp.bfloat16) for x in xs]   # zero pad

    # Split the weight along in-channels, reorder each block to (ky, kx, c_in).
    w_blocks, off = [], 0
    for ci in c_ins:
        wb = jnp.transpose(wt[:, off:off + ci], (0, 2, 3, 1)).reshape(c_out, 9 * ci)
        w_blocks.append(wb)
        off += ci
    w2 = jnp.concatenate(w_blocks, axis=1).astype(jnp.bfloat16)   # (C_out, 9*sumC)
    k_tot = 9 * sum(c_ins)
    b2 = b.reshape(c_out, 1).astype(jnp.float32)

    flops = 2 * ng * r * w * c_out * k_tot
    bytes_accessed = (sum(xg.size for xg in xgs) * 2 + w2.size * 2
                      + (ng * c_out * r * w + ng * c_out * 2) * 4)

    in_specs = [pl.BlockSpec((1, ci, r + 2, w + 2), lambda i: (i, 0, 0, 0))
                for ci in c_ins]
    in_specs += [pl.BlockSpec((c_out, k_tot), lambda i: (0, 0)),
                 pl.BlockSpec((c_out, 1), lambda i: (0, 0))]

    y_flat, stats = pl.pallas_call(
        functools.partial(_conv3x3_relu_stats_kernel, rows=r, width=w, n_in=len(xs)),
        grid=(ng,),
        in_specs=in_specs,
        out_specs=(
            pl.BlockSpec((1, c_out, r * w), lambda i: (i, 0, 0)),
            pl.BlockSpec((1, c_out, 2), lambda i: (i, 0, 0)),
        ),
        out_shape=(
            jax.ShapeDtypeStruct((ng, c_out, r * w), jnp.float32),
            jax.ShapeDtypeStruct((ng, c_out, 2), jnp.float32),
        ),
        compiler_params=pltpu.CompilerParams(
            dimension_semantics=("parallel",), vmem_limit_bytes=_VMEM_LIMIT),
        cost_estimate=pl.CostEstimate(
            flops=flops, transcendentals=0, bytes_accessed=bytes_accessed),
    )(*xgs, w2, b2)

    # Finalize training-mode BN stats (tiny (NG, C, 2) reduction; keeps all of
    # phase 1 "parallel" / race-free across cores).
    count = n * h * w
    mean = jnp.sum(stats[:, :, 0], axis=0) / count
    var = jnp.sum(stats[:, :, 1], axis=0) / count - mean * mean   # biased
    scale = gamma * lax.rsqrt(var + EPS)
    shift = beta - mean * scale

    out_flat = pl.pallas_call(
        _bn_apply_kernel,
        grid=(ng,),
        in_specs=[
            pl.BlockSpec((1, c_out, r * w), lambda i: (i, 0, 0)),
            pl.BlockSpec((c_out, 1), lambda i: (0, 0)),
            pl.BlockSpec((c_out, 1), lambda i: (0, 0)),
        ],
        out_specs=pl.BlockSpec((1, c_out, r * w), lambda i: (i, 0, 0)),
        out_shape=jax.ShapeDtypeStruct((ng, c_out, r * w), jnp.float32),
        compiler_params=pltpu.CompilerParams(
            dimension_semantics=("parallel",), vmem_limit_bytes=_VMEM_LIMIT),
    )(y_flat, scale.reshape(c_out, 1).astype(jnp.float32),
      shift.reshape(c_out, 1).astype(jnp.float32))

    return _ungroup_rows(out_flat, n, g, r, w)


# ---------------------------------------------------------------------------
# UpsampleBlock (up_mode='up_conv'): bilinear x2 (align_corners=False) + 1x1 conv
# Fused in one kernel; the 1x1 conv is applied first (it commutes with the
# interpolation since the bilinear weights sum to 1 and edge-padding commutes
# with a per-pixel conv), shrinking the interpolation work 4x.
# ---------------------------------------------------------------------------
def _upsample2x_conv1x1_kernel(x_ref, w_ref, b_ref, o_ref, *, rows, width):
    # x_ref: (1, C_in, rows+2, width+2)   bf16  edge-padded row-group
    # w_ref: (C_out, C_in)                bf16
    # b_ref: (C_out, 1)                   f32
    # o_ref: (1, C_out, 4, rows*width)    f32   axis 2 = 2*row_parity + col_parity
    c_in = x_ref.shape[1]
    x = x_ref[0].reshape(c_in, (rows + 2) * (width + 2))
    z = jnp.dot(w_ref[...], x, preferred_element_type=jnp.float32) + b_ref[...]
    c_out = z.shape[0]
    z = z.reshape(c_out, rows + 2, width + 2)
    prev = z[:, 0:rows, :]
    cur = z[:, 1:rows + 1, :]
    nxt = z[:, 2:rows + 2, :]
    v_by_rp = (0.25 * prev + 0.75 * cur,        # output rows 2k
               0.75 * cur + 0.25 * nxt)         # output rows 2k+1
    for rp in range(2):
        v = v_by_rp[rp]                                          # (C_out, rows, W+2)
        even = 0.25 * v[:, :, 0:width] + 0.75 * v[:, :, 1:width + 1]    # cols 2w
        odd = 0.75 * v[:, :, 1:width + 1] + 0.25 * v[:, :, 2:width + 2]  # cols 2w+1
        o_ref[0, :, 2 * rp + 0, :] = even.reshape(c_out, rows * width)
        o_ref[0, :, 2 * rp + 1, :] = odd.reshape(c_out, rows * width)


def upsample2x_conv1x1(x, wt, b, *, max_tile_pixels=4096):
    n, c_in, h, w = x.shape
    c_out = wt.shape[0]
    r = _pick_row_tile(h, w, max_tile_pixels)
    g = h // r
    ng = n * g

    xg = _group_rows(x, r, "edge").astype(jnp.bfloat16)   # edge pad == index clamp
    w2 = wt.reshape(c_out, c_in).astype(jnp.bfloat16)
    b2 = b.reshape(c_out, 1).astype(jnp.float32)

    o = pl.pallas_call(
        functools.partial(_upsample2x_conv1x1_kernel, rows=r, width=w),
        grid=(ng,),
        in_specs=[
            pl.BlockSpec((1, c_in, r + 2, w + 2), lambda i: (i, 0, 0, 0)),
            pl.BlockSpec((c_out, c_in), lambda i: (0, 0)),
            pl.BlockSpec((c_out, 1), lambda i: (0, 0)),
        ],
        out_specs=pl.BlockSpec((1, c_out, 4, r * w), lambda i: (i, 0, 0, 0)),
        out_shape=jax.ShapeDtypeStruct((ng, c_out, 4, r * w), jnp.float32),
        compiler_params=pltpu.CompilerParams(
            dimension_semantics=("parallel",), vmem_limit_bytes=_VMEM_LIMIT),
    )(xg, w2, b2)

    # (NG, C, 2*rp+cp, r*w) -> (N, C, 2H, 2W); interleave parities in the wrapper.
    o = o.reshape(n, g, c_out, 2, 2, r, w)
    o = jnp.transpose(o, (0, 2, 1, 5, 3, 6, 4)).reshape(n, c_out, 2 * h, 2 * w)
    return o


# ---------------------------------------------------------------------------
# Full UpConvBlock forward (up_mode='up_conv', shortcut=False).
# ---------------------------------------------------------------------------
def upconv_block(x, skip, params, *, conv_bridge=True, max_tile_pixels=4096):
    up = upsample2x_conv1x1(x, params["up_w"], params["up_b"],
                            max_tile_pixels=max_tile_pixels)
    if conv_bridge:
        bridge = conv3x3_relu_bn(skip, params["br_w"], params["br_b"],
                                 params["br_gamma"], params["br_beta"],
                                 max_tile_pixels=max_tile_pixels)
    else:
        bridge = skip
    # concat([up, bridge], channel) is virtual: the first ConvBlock conv takes
    # both operands and its weight is split along the in-channel axis.
    y = conv3x3_relu_bn([up, bridge], params["c1_w"], params["c1_b"],
                        params["c1_gamma"], params["c1_beta"],
                        max_tile_pixels=max_tile_pixels)
    y = conv3x3_relu_bn(y, params["c2_w"], params["c2_b"],
                        params["c2_gamma"], params["c2_beta"],
                        max_tile_pixels=max_tile_pixels)
    # TODO(synk): shortcut=True (conv1x1 + BN residual) and up_mode='transp_conv'
    # variants of the PyTorch module are not implemented (defaults do not use them).
    return y


# ---------------------------------------------------------------------------
# Pure-JAX reference (f32 end-to-end).
# ---------------------------------------------------------------------------
def _conv_bn_ref(x, wt, b, gamma, beta):
    y = lax.conv_general_dilated(x, wt, (1, 1), ((1, 1), (1, 1)),
                                 dimension_numbers=("NCHW", "OIHW", "NCHW"))
    y = jnp.maximum(y + b[None, :, None, None], 0.0)
    mean = jnp.mean(y, axis=(0, 2, 3), keepdims=True)
    var = jnp.mean((y - mean) ** 2, axis=(0, 2, 3), keepdims=True)
    y = (y - mean) * lax.rsqrt(var + EPS)
    return y * gamma[None, :, None, None] + beta[None, :, None, None]


def _bilinear2x_ref(x):
    n, c, h, w = x.shape
    xp = jnp.pad(x, ((0, 0), (0, 0), (1, 1), (1, 1)), mode="edge")
    even = 0.25 * xp[:, :, 0:h, :] + 0.75 * xp[:, :, 1:h + 1, :]
    odd = 0.75 * xp[:, :, 1:h + 1, :] + 0.25 * xp[:, :, 2:h + 2, :]
    v = jnp.stack([even, odd], axis=3).reshape(n, c, 2 * h, w + 2)
    heven = 0.25 * v[:, :, :, 0:w] + 0.75 * v[:, :, :, 1:w + 1]
    hodd = 0.75 * v[:, :, :, 1:w + 1] + 0.25 * v[:, :, :, 2:w + 2]
    return jnp.stack([heven, hodd], axis=4).reshape(n, c, 2 * h, 2 * w)


def _upconv_ref(x, skip, params, conv_bridge=True):
    up = _bilinear2x_ref(x)
    up = lax.conv_general_dilated(up, params["up_w"], (1, 1), ((0, 0), (0, 0)),
                                  dimension_numbers=("NCHW", "OIHW", "NCHW"))
    up = up + params["up_b"][None, :, None, None]
    if conv_bridge:
        bridge = _conv_bn_ref(skip, params["br_w"], params["br_b"],
                              params["br_gamma"], params["br_beta"])
    else:
        bridge = skip
    cat = jnp.concatenate([up, bridge], axis=1)
    y = _conv_bn_ref(cat, params["c1_w"], params["c1_b"],
                     params["c1_gamma"], params["c1_beta"])
    return _conv_bn_ref(y, params["c2_w"], params["c2_b"],
                        params["c2_gamma"], params["c2_beta"])


if __name__ == "__main__":
    key = jax.random.PRNGKey(0)
    n, in_c, out_c, h, w = 2, 8, 4, 8, 8          # skip / output spatial = 16x16
    ks = jax.random.split(key, 16)

    x = jax.random.normal(ks[0], (n, in_c, h, w), jnp.float32)
    skip = jax.random.normal(ks[1], (n, out_c, 2 * h, 2 * w), jnp.float32)

    params = {
        "up_w": 0.2 * jax.random.normal(ks[2], (out_c, in_c, 1, 1), jnp.float32),
        "up_b": 0.1 * jax.random.normal(ks[3], (out_c,), jnp.float32),
        "br_w": 0.2 * jax.random.normal(ks[4], (out_c, out_c, 3, 3), jnp.float32),
        "br_b": 0.1 * jax.random.normal(ks[5], (out_c,), jnp.float32),
        "br_gamma": 1.0 + 0.1 * jax.random.normal(ks[6], (out_c,), jnp.float32),
        "br_beta": 0.1 * jax.random.normal(ks[7], (out_c,), jnp.float32),
        "c1_w": 0.2 * jax.random.normal(ks[8], (out_c, 2 * out_c, 3, 3), jnp.float32),
        "c1_b": 0.1 * jax.random.normal(ks[9], (out_c,), jnp.float32),
        "c1_gamma": 1.0 + 0.1 * jax.random.normal(ks[10], (out_c,), jnp.float32),
        "c1_beta": 0.1 * jax.random.normal(ks[11], (out_c,), jnp.float32),
        "c2_w": 0.2 * jax.random.normal(ks[12], (out_c, out_c, 3, 3), jnp.float32),
        "c2_b": 0.1 * jax.random.normal(ks[13], (out_c,), jnp.float32),
        "c2_gamma": 1.0 + 0.1 * jax.random.normal(ks[14], (out_c,), jnp.float32),
        "c2_beta": 0.1 * jax.random.normal(ks[15], (out_c,), jnp.float32),
    }

    # max_tile_pixels=32 forces multi-tile grids (and the halo'd row-group path)
    # even at this toy size; the default (4096) is the perf-sensible setting.
    out = upconv_block(x, skip, params, conv_bridge=True, max_tile_pixels=32)
    out = jax.block_until_ready(out)

    ref = _upconv_ref(x, skip, params, conv_bridge=True)
    assert out.shape == (n, out_c, 2 * h, 2 * w)
    # bf16 MXU operands => looser tolerance than pure f32.
    assert jnp.allclose(out, ref, atol=5e-2, rtol=5e-2), float(
        jnp.max(jnp.abs(out - ref)))

    print("KERNEL_OK")
</pallas_src>

<mosaic_0001>
module attributes {stable_mosaic.version = 11 : i64} {
  func.func @_upsample2x_conv1x1_kernel(%arg0: i32, %arg1: memref<1x8x6x10xbf16, #tpu.memory_space<vmem>>, %arg2: memref<4x8xbf16, #tpu.memory_space<vmem>>, %arg3: memref<4x1xf32, #tpu.memory_space<vmem>>, %arg4: memref<1x4x4x32xf32, #tpu.memory_space<vmem>>) attributes {dimension_semantics = [#tpu.dimension_semantics<parallel>], iteration_bounds = array<i64: 4>, scalar_prefetch = 0 : i64, scratch_operands = 0 : i64, tpu.core_type = #tpu.core_type<tc>, window_params = [{transform_indices = @transform_0, window_bounds = array<i64: 1, 8, 6, 10>}, {pipeline_mode = #tpu.pipeline_mode<synchronous>, transform_indices = @transform_1, window_bounds = array<i64: 4, 8>}, {pipeline_mode = #tpu.pipeline_mode<synchronous>, transform_indices = @transform_2, window_bounds = array<i64: 4, 1>}, {transform_indices = @transform_3, window_bounds = array<i64: 1, 4, 4, 32>}]} {
    %c0 = arith.constant 0 : index
    %c0_0 = arith.constant 0 : index
    %c0_1 = arith.constant 0 : index
    %c0_2 = arith.constant 0 : index
    %0 = vector.load %arg1[%c0, %c0_0, %c0_1, %c0_2] : memref<1x8x6x10xbf16, #tpu.memory_space<vmem>>, vector<1x8x6x10xbf16>
    %1 = vector.shape_cast %0 : vector<1x8x6x10xbf16> to vector<8x6x10xbf16>
    %2 = vector.shape_cast %1 : vector<8x6x10xbf16> to vector<8x60xbf16>
    %c0_3 = arith.constant 0 : index
    %c0_4 = arith.constant 0 : index
    %3 = vector.load %arg2[%c0_3, %c0_4] : memref<4x8xbf16, #tpu.memory_space<vmem>>, vector<4x8xbf16>
    %cst = arith.constant dense<0.000000e+00> : vector<4x60xf32>
    %4 = tpu.matmul %3, %2, %cst {dimension_numbers = #tpu.dot_dimension_numbers<[1], [0], [0], [1], [0, 0, 1, 1], [], []>} : vector<4x8xbf16>, vector<8x60xbf16>, vector<4x60xf32> -> vector<4x60xf32>
    %c0_5 = arith.constant 0 : index
    %c0_6 = arith.constant 0 : index
    %5 = vector.load %arg3[%c0_5, %c0_6] : memref<4x1xf32, #tpu.memory_space<vmem>>, vector<4x1xf32>
    %6 = vector.broadcast %5 : vector<4x1xf32> to vector<4x60xf32>
    %7 = arith.addf %4, %6 : vector<4x60xf32>
    %8 = vector.shape_cast %7 : vector<4x60xf32> to vector<4x6x10xf32>
    %9 = vector.extract_strided_slice %8 {offsets = [0, 0, 0], sizes = [4, 4, 10], strides = [1, 1, 1]} : vector<4x6x10xf32> to vector<4x4x10xf32>
    %10 = vector.extract_strided_slice %8 {offsets = [0, 1, 0], sizes = [4, 4, 10], strides = [1, 1, 1]} : vector<4x6x10xf32> to vector<4x4x10xf32>
    %11 = vector.extract_strided_slice %8 {offsets = [0, 2, 0], sizes = [4, 4, 10], strides = [1, 1, 1]} : vector<4x6x10xf32> to vector<4x4x10xf32>
    %cst_7 = arith.constant 2.500000e-01 : f32
    %12 = vector.broadcast %cst_7 : f32 to vector<4x4x10xf32>
    %13 = arith.mulf %12, %9 : vector<4x4x10xf32>
    %cst_8 = arith.constant 7.500000e-01 : f32
    %14 = vector.broadcast %cst_8 : f32 to vector<4x4x10xf32>
    %15 = arith.mulf %14, %10 : vector<4x4x10xf32>
    %16 = arith.addf %13, %15 : vector<4x4x10xf32>
    %cst_9 = arith.constant 7.500000e-01 : f32
    %17 = vector.broadcast %cst_9 : f32 to vector<4x4x10xf32>
    %18 = arith.mulf %17, %10 : vector<4x4x10xf32>
    %cst_10 = arith.constant 2.500000e-01 : f32
    %19 = vector.broadcast %cst_10 : f32 to vector<4x4x10xf32>
    %20 = arith.mulf %19, %11 : vector<4x4x10xf32>
    %21 = arith.addf %18, %20 : vector<4x4x10xf32>
    %22 = vector.extract_strided_slice %16 {offsets = [0, 0, 0], sizes = [4, 4, 8], strides = [1, 1, 1]} : vector<4x4x10xf32> to vector<4x4x8xf32>
    %cst_11 = arith.constant 2.500000e-01 : f32
    %23 = vector.broadcast %cst_11 : f32 to vector<4x4x8xf32>
    %24 = arith.mulf %23, %22 : vector<4x4x8xf32>
    %25 = vector.extract_strided_slice %16 {offsets = [0, 0, 1], sizes = [4, 4, 8], strides = [1, 1, 1]} : vector<4x4x10xf32> to vector<4x4x8xf32>
    %cst_12 = arith.constant 7.500000e-01 : f32
    %26 = vector.broadcast %cst_12 : f32 to vector<4x4x8xf32>
    %27 = arith.mulf %26, %25 : vector<4x4x8xf32>
    %28 = arith.addf %24, %27 : vector<4x4x8xf32>
    %29 = vector.extract_strided_slice %16 {offsets = [0, 0, 1], sizes = [4, 4, 8], strides = [1, 1, 1]} : vector<4x4x10xf32> to vector<4x4x8xf32>
    %cst_13 = arith.constant 7.500000e-01 : f32
    %30 = vector.broadcast %cst_13 : f32 to vector<4x4x8xf32>
    %31 = arith.mulf %30, %29 : vector<4x4x8xf32>
    %32 = vector.extract_strided_slice %16 {offsets = [0, 0, 2], sizes = [4, 4, 8], strides = [1, 1, 1]} : vector<4x4x10xf32> to vector<4x4x8xf32>
    %cst_14 = arith.constant 2.500000e-01 : f32
    %33 = vector.broadcast %cst_14 : f32 to vector<4x4x8xf32>
    %34 = arith.mulf %33, %32 : vector<4x4x8xf32>
    %35 = arith.addf %31, %34 : vector<4x4x8xf32>
    %36 = vector.shape_cast %28 : vector<4x4x8xf32> to vector<4x32xf32>
    %c0_15 = arith.constant 0 : index
    %c0_16 = arith.constant 0 : index
    %c0_17 = arith.constant 0 : index
    %c0_18 = arith.constant 0 : index
    %37 = vector.load %arg4[%c0_15, %c0_16, %c0_17, %c0_18] : memref<1x4x4x32xf32, #tpu.memory_space<vmem>>, vector<1x4x1x32xf32>
    %38 = vector.shape_cast %37 : vector<1x4x1x32xf32> to vector<4x32xf32>
    %39 = vector.shape_cast %36 : vector<4x32xf32> to vector<1x4x1x32xf32>
    tpu.vector_store %arg4[%c0_15, %c0_16, %c0_17, %c0_18], %39 {strides = array<i32>} : memref<1x4x4x32xf32, #tpu.memory_space<vmem>>, vector<1x4x1x32xf32>,
    %40 = vector.shape_cast %35 : vector<4x4x8xf32> to vector<4x32xf32>
    %c0_19 = arith.constant 0 : index
    %c0_20 = arith.constant 0 : index
    %c1 = arith.constant 1 : index
    %c0_21 = arith.constant 0 : index
    %41 = vector.load %arg4[%c0_19, %c0_20, %c1, %c0_21] : memref<1x4x4x32xf32, #tpu.memory_space<vmem>>, vector<1x4x1x32xf32>
    %42 = vector.shape_cast %41 : vector<1x4x1x32xf32> to vector<4x32xf32>
    %43 = vector.shape_cast %40 : vector<4x32xf32> to vector<1x4x1x32xf32>
    tpu.vector_store %arg4[%c0_19, %c0_20, %c1, %c0_21], %43 {strides = array<i32>} : memref<1x4x4x32xf32, #tpu.memory_space<vmem>>, vector<1x4x1x32xf32>,
    %44 = vector.extract_strided_slice %21 {offsets = [0, 0, 0], sizes = [4, 4, 8], strides = [1, 1, 1]} : vector<4x4x10xf32> to vector<4x4x8xf32>
    %cst_22 = arith.constant 2.500000e-01 : f32
    %45 = vector.broadcast %cst_22 : f32 to vector<4x4x8xf32>
    %46 = arith.mulf %45, %44 : vector<4x4x8xf32>
    %47 = vector.extract_strided_slice %21 {offsets = [0, 0, 1], sizes = [4, 4, 8], strides = [1, 1, 1]} : vector<4x4x10xf32> to vector<4x4x8xf32>
    %cst_23 = arith.constant 7.500000e-01 : f32
    %48 = vector.broadcast %cst_23 : f32 to vector<4x4x8xf32>
    %49 = arith.mulf %48, %47 : vector<4x4x8xf32>
    %50 = arith.addf %46, %49 : vector<4x4x8xf32>
    %51 = vector.extract_strided_slice %21 {offsets = [0, 0, 1], sizes = [4, 4, 8], strides = [1, 1, 1]} : vector<4x4x10xf32> to vector<4x4x8xf32>
    %cst_24 = arith.constant 7.500000e-01 : f32
    %52 = vector.broadcast %cst_24 : f32 to vector<4x4x8xf32>
    %53 = arith.mulf %52, %51 : vector<4x4x8xf32>
    %54 = vector.extract_strided_slice %21 {offsets = [0, 0, 2], sizes = [4, 4, 8], strides = [1, 1, 1]} : vector<4x4x10xf32> to vector<4x4x8xf32>
    %cst_25 = arith.constant 2.500000e-01 : f32
    %55 = vector.broadcast %cst_25 : f32 to vector<4x4x8xf32>
    %56 = arith.mulf %55, %54 : vector<4x4x8xf32>
    %57 = arith.addf %53, %56 : vector<4x4x8xf32>
    %58 = vector.shape_cast %50 : vector<4x4x8xf32> to vector<4x32xf32>
    %c0_26 = arith.constant 0 : index
    %c0_27 = arith.constant 0 : index
    %c2 = arith.constant 2 : index
    %c0_28 = arith.constant 0 : index
    %59 = vector.load %arg4[%c0_26, %c0_27, %c2, %c0_28] : memref<1x4x4x32xf32, #tpu.memory_space<vmem>>, vector<1x4x1x32xf32>
    %60 = vector.shape_cast %59 : vector<1x4x1x32xf32> to vector<4x32xf32>
    %61 = vector.shape_cast %58 : vector<4x32xf32> to vector<1x4x1x32xf32>
    tpu.vector_store %arg4[%c0_26, %c0_27, %c2, %c0_28], %61 {strides = array<i32>} : memref<1x4x4x32xf32, #tpu.memory_space<vmem>>, vector<1x4x1x32xf32>,
    %62 = vector.shape_cast %57 : vector<4x4x8xf32> to vector<4x32xf32>
    %c0_29 = arith.constant 0 : index
    %c0_30 = arith.constant 0 : index
    %c3 = arith.constant 3 : index
    %c0_31 = arith.constant 0 : index
    %63 = vector.load %arg4[%c0_29, %c0_30, %c3, %c0_31] : memref<1x4x4x32xf32, #tpu.memory_space<vmem>>, vector<1x4x1x32xf32>
    %64 = vector.shape_cast %63 : vector<1x4x1x32xf32> to vector<4x32xf32>
    %65 = vector.shape_cast %62 : vector<4x32xf32> to vector<1x4x1x32xf32>
    tpu.vector_store %arg4[%c0_29, %c0_30, %c3, %c0_31], %65 {strides = array<i32>} : memref<1x4x4x32xf32, #tpu.memory_space<vmem>>, vector<1x4x1x32xf32>,
    return
  }
  func.func @transform_0(%arg0: i32) -> (i32, i32, i32, i32) {
    %c0_i32 = arith.constant 0 : i32
    %c0_i32_0 = arith.constant 0 : i32
    %c0_i32_1 = arith.constant 0 : i32
    %c0_i32_2 = arith.constant 0 : i32
    return %arg0, %c0_i32, %c0_i32_0, %c0_i32_1 : i32, i32, i32, i32
  }
  func.func @transform_1(%arg0: i32) -> (i32, i32) {
    %c0_i32 = arith.constant 0 : i32
    %c0_i32_0 = arith.constant 0 : i32
    %c0_i32_1 = arith.constant 0 : i32
    return %c0_i32, %c0_i32_0 : i32, i32
  }
  func.func @transform_2(%arg0: i32) -> (i32, i32) {
    %c0_i32 = arith.constant 0 : i32
    %c0_i32_0 = arith.constant 0 : i32
    %c0_i32_1 = arith.constant 0 : i32
    return %c0_i32, %c0_i32_0 : i32, i32
  }
  func.func @transform_3(%arg0: i32) -> (i32, i32, i32, i32) {
    %c0_i32 = arith.constant 0 : i32
    %c0_i32_0 = arith.constant 0 : i32
    %c0_i32_1 = arith.constant 0 : i32
    %c0_i32_2 = arith.constant 0 : i32
    return %arg0, %c0_i32, %c0_i32_0, %c0_i32_1 : i32, i32, i32, i32
  }
}

</mosaic_0001>

<llo_original>
// kernel: tpu_custom_call.1
$region0: #{tpu_custom_call.1}
  #allocation0 [shape = 'u32[]', space=smem, size = 0x4, offset = 0x4, fixed_abs, tag = 'smem constant byte address 0x4 - core index']
  #allocation1 [shape = 'u32[144,128]{1,0:T(1,128)}', space=vmem, size = 0x12000, scoped, tag = 'internal scratch']
  %s0 = inlined_call_operand.vmem [shape: bf16[4,8,6,10], index: 0, kind: input, shape index: {}]
  %s1 = inlined_call_operand.vmem [shape: bf16[4,8], index: 1, kind: input, shape index: {}]
  %s2 = inlined_call_operand.vmem [shape: f32[4,1], index: 2, kind: input, shape index: {}]
  %s3 = inlined_call_operand.hbm [shape: f32[4,4,4,32], index: 3, kind: output, shape index: {}]
  %s4 = sld [smem:[#allocation0]]
  $region45: #{tpu_custom_call.1} parent=0
    _
  %s6 = ssub.s32 1, %s4
  %s7 = scalar_select 0, %s6, %s4
  $region1: #{tpu_custom_call.1} parent=0
    #allocation2 [shape = 'u8[16384]{0}', space=vmem, size = 0x4000, scoped, tag = 'output window, operand 0']
    #allocation3 [shape = 's32[2]{0}', space=sflag, size = 0x8, scoped, tag = 'scoped memory for tpu_custom_call.1']
    %8 = vsyncpa [#allocation3], 0
    %s9 = scalar_lea.sflag [#allocation3], 1
    %10 = vsyncpa %s9, 0
    loop: start=0, step=1, limit=6
    $region2: #{tpu_custom_call.1} parent=1 // loop_pre_header
      _
    $region3: #{tpu_custom_call.1} parent=1 // loop_header
      %s12 = sphi 0, %s16
      %p13 = scmp.ge.s32.totalorder %s12, 6
      %s22 = sphi 0, %s24
      %s25 = sphi 0, %s22
      %s26 = sphi 0, %s25
      %s42 = sphi 0, %s26
      %s46 = sphi 0, %s46
      %s48 = sphi 0, %s46
      %s49 = sphi 0, %s48
      %s63 = sphi 0, %s49
      %s67 = sphi 0, %s67
      %s69 = sphi 0, %s67
      %s70 = sphi 0, %s69
      %s84 = sphi 0, %s70
      %s90 = sphi 0, %s92
      %s93 = sphi 0, %s90
      %s94 = sphi 0, %s93
      %s110 = sphi 0, %s94
    $region4: #{tpu_custom_call.1} parent=1 // loop_header_branch
      %15 = sbr.rel (%p13) target = $region8
    $region5: #{tpu_custom_call.1} parent=1 // loop_body
      %s17 = ssub.s32 %s12, 1
      %s18 = ssub.s32 %s12, 2
      %s19 = sadd.s32 %s12, 1
      %s20 = ssub.s32 %s12, %s19
      %p21 = scmp.eq.s32.totalorder %s20, 0
      %s23 = sadd.s32 %s22, 1
      %s24 = scalar_select %p21, %s22, %s23
      %p27 = pneg %p21
      %p28 = scmp.eq.s32.totalorder %s12, 3
      %p29 = por %p27, %p28
      %p30 = scmp.ne.s32.totalorder %s22, %s25
      %p31 = scmp.eq.s32.totalorder %s12, 0
      %p32 = por %p30, %p31
      %p33 = scmp.ne.s32.totalorder %s22, %s25
      %p34 = scmp.eq.s32.totalorder %s17, 3
      %p35 = por %p33, %p34
      %p36 = scmp.ne.s32.totalorder %s25, %s26
      %p37 = scmp.eq.s32.totalorder %s17, 0
      %p38 = por %p36, %p37
      %p39 = scmp.ne.s32.totalorder %s25, %s26
      %p40 = scmp.eq.s32.totalorder %s18, 3
      %p41 = por %p39, %p40
      %p43 = scmp.ne.s32.totalorder %s26, %s42
      %p44 = scmp.eq.s32.totalorder %s18, 0
      %p45 = por %p43, %p44
      %s47 = sadd.s32 %s46, 1
      %p50 = scmp.eq.s32.totalorder %s12, 3
      %p51 = scmp.ne.s32.totalorder %s46, %s48
      %p52 = scmp.eq.s32.totalorder %s12, 0
      %p53 = por %p51, %p52
      %p54 = scmp.ne.s32.totalorder %s46, %s48
      %p55 = scmp.eq.s32.totalorder %s17, 3
      %p56 = por %p54, %p55
      %p57 = scmp.ne.s32.totalorder %s48, %s49
      %p58 = scmp.eq.s32.totalorder %s17, 0
      %p59 = por %p57, %p58
      %p60 = scmp.ne.s32.totalorder %s48, %s49
      %p61 = scmp.eq.s32.totalorder %s18, 3
      %p62 = por %p60, %p61
      %p64 = scmp.ne.s32.totalorder %s49, %s63
      %p65 = scmp.eq.s32.totalorder %s18, 0
      %p66 = por %p64, %p65
      %s68 = sadd.s32 %s67, 1
      %p71 = scmp.eq.s32.totalorder %s12, 3
      %p72 = scmp.ne.s32.totalorder %s67, %s69
      %p73 = scmp.eq.s32.totalorder %s12, 0
      %p74 = por %p72, %p73
      %p75 = scmp.ne.s32.totalorder %s67, %s69
      %p76 = scmp.eq.s32.totalorder %s17, 3
      %p77 = por %p75, %p76
      %p78 = scmp.ne.s32.totalorder %s69, %s70
      %p79 = scmp.eq.s32.totalorder %s17, 0
      %p80 = por %p78, %p79
      %p81 = scmp.ne.s32.totalorder %s69, %s70
      %p82 = scmp.eq.s32.totalorder %s18, 3
      %p83 = por %p81, %p82
      %p85 = scmp.ne.s32.totalorder %s70, %s84
      %p86 = scmp.eq.s32.totalorder %s18, 0
      %p87 = por %p85, %p86
      %s88 = ssub.s32 %s12, %s19
      %p89 = scmp.eq.s32.totalorder %s88, 0
      %s91 = sadd.s32 %s90, 1
      %s92 = scalar_select %p89, %s90, %s91
      %p95 = pneg %p89
      %p96 = scmp.eq.s32.totalorder %s12, 3
      %p97 = por %p95, %p96
      %p98 = scmp.ne.s32.totalorder %s90, %s93
      %p99 = scmp.eq.s32.totalorder %s12, 0
      %p100 = por %p98, %p99
      %p101 = scmp.ne.s32.totalorder %s90, %s93
      %p102 = scmp.eq.s32.totalorder %s17, 3
      %p103 = por %p101, %p102
      %p104 = scmp.ne.s32.totalorder %s93, %s94
      %p105 = scmp.eq.s32.totalorder %s17, 0
      %p106 = por %p104, %p105
      %p107 = scmp.ne.s32.totalorder %s93, %s94
      %p108 = scmp.eq.s32.totalorder %s18, 3
      %p109 = por %p107, %p108
      %p111 = scmp.ne.s32.totalorder %s94, %s110
      %p112 = scmp.eq.s32.totalorder %s18, 0
      %p113 = por %p111, %p112
      %p114 = scmp.le.s32.totalorder 1, %s12
      %p115 = scmp.lt.s32.totalorder %s12, 5
      %p116 = pnand %p114, %p115
      %p117 = pneg %p116
      // Predicated region
      $region9: #{tpu_custom_call.1} parent=5 // pred_check
        _
      $region10: #{tpu_custom_call.1} parent=5 // pred_check_branch
        %119 = sbr.rel (%p116) target = $region12
      $region11: #{tpu_custom_call.1} parent=5 // pred_region
        %s120 = ssub.s32 %s12, 1
        // Predicated region
        $region13: #{tpu_custom_call.1} parent=11 // pred_check
          %p121 = pneg %p59
        $region14: #{tpu_custom_call.1} parent=11 // pred_check_branch
          %123 = sbr.rel (%p121) target = $region16
        $region15: #{tpu_custom_call.1} parent=11 // pred_region
          _
        $region16: #{tpu_custom_call.1} parent=11 // pred_fallthru
          _
        // Predicated region
        $region17: #{tpu_custom_call.1} parent=11 // pred_check
          %p124 = pneg %p80
        $region18: #{tpu_custom_call.1} parent=11 // pred_check_branch
          %126 = sbr.rel (%p124) target = $region20
        $region19: #{tpu_custom_call.1} parent=11 // pred_region
          _
        $region20: #{tpu_custom_call.1} parent=11 // pred_fallthru
          _
      $region12: #{tpu_custom_call.1} parent=5 // pred_fallthru
        _
      %p127 = scmp.lt.s32.totalorder %s12, 4
      // Predicated region
      $region21: #{tpu_custom_call.1} parent=5 // pred_check
        %p128 = pneg %p127
      $region22: #{tpu_custom_call.1} parent=5 // pred_check_branch
        %130 = sbr.rel (%p128) target = $region24
      $region23: #{tpu_custom_call.1} parent=5 // pred_region
        // Predicated region
        $region25: #{tpu_custom_call.1} parent=23 // pred_check
          %p131 = pneg %p32
        $region26: #{tpu_custom_call.1} parent=23 // pred_check_branch
          %133 = sbr.rel (%p131) target = $region28
        $region27: #{tpu_custom_call.1} parent=23 // pred_region
          %p134 = scmp.lt.s32.totalorder %s12, 3
          %s135 = scalar_select %p134, %s12, 3
          %s136 = smul.addr %s135, 8
          %s137 = smul.addr %s136, 4
          %s138 = scalar_lea.vmem %s0, %s137
        $region28: #{tpu_custom_call.1} parent=23 // pred_fallthru
          _
      $region24: #{tpu_custom_call.1} parent=5 // pred_fallthru
        _
      %p139 = scmp.le.s32.totalorder 1, %s12
      %p140 = scmp.lt.s32.totalorder %s12, 5
      %p141 = pnand %p139, %p140
      %p142 = pneg %p141
      // Predicated region
      $region29: #{tpu_custom_call.1} parent=5 // pred_check
        _
      $region30: #{tpu_custom_call.1} parent=5 // pred_check_branch
        %144 = sbr.rel (%p141) target = $region32
      $region31: #{tpu_custom_call.1} parent=5 // pred_region
        %s145 = ssub.s32 %s12, 1
        %p146 = scmp.lt.s32.totalorder %s17, 3
        %s147 = scalar_select %p146, %s17, 3
        %s148 = smul.addr %s147, 8
        %s149 = smul.addr %s148, 4
        %s150 = scalar_lea.vmem %s0, %s149
        %p151 = pneg %p38
        %p152 = pneg %p35
        %p153 = pneg %p59
        %p154 = pneg %p56
        %p155 = pneg %p80
        %p156 = pneg %p77
        %p157 = pneg %p106
        %p158 = pneg %p103
        %s159 = sand.u32 %s93, 1
        %s160 = scalar_lea.sflag [#allocation3], %s159
        %s161 = sand.u32 %s93, 1
        %s162 = smul.addr %s161, 16
        %s163 = scalar_lea.vmem [#allocation2], %s162
        %p164 = scmp.lt.s32.totalorder %s17, 3
        %s165 = scalar_select %p164, %s17, 3
        %s166 = smul.addr %s165, 8
        %s167 = smul.addr %s166, 4
        %s168 = scalar_lea.vmem %s0, %s167
        %v170 = vld [vmem:[%s168] sm:$0x7]
        %v171 = vld [vmem:[%s168 + $0x4] sm:$0x7]
        %v172 = vld [vmem:[%s168 + $0x8] sm:$0x7]
        %v173 = vld [vmem:[%s168 + $0xc] sm:$0x7]
        %v174 = vld [vmem:[%s168 + $0x10] sm:$0x7]
        %v175 = vld [vmem:[%s168 + $0x14] sm:$0x7]
        %v176 = vld [vmem:[%s168 + $0x18] sm:$0x7]
        %v177 = vld [vmem:[%s168 + $0x1c] sm:$0x7]
        %v178 = vcombine.low %v170, %v174
        %v180 = vunpack.c.l.s4 1983009808
        %v181 = vunpack.c.0.s8 %v180
        %v182 = vlaneseq
        %v183 = vshrl.u32 %v182, 7
        %v184 = vsub.s32 %v181, %v183
        %v185 = vrot.slane %v178, %v184
        %v186 = vcombine.low %v172, %v176
        %v188 = vunpack.c.l.s4 1983009808
        %v189 = vunpack.c.0.s8 %v188
        %v190 = vlaneseq
        %v191 = vshrl.u32 %v190, 7
        %v192 = vsub.s32 %v189, %v191
        %v193 = vrot.slane %v186, %v192
        %v194 = vcombine.low %v185, %v193
        %v195 = vcombine.high %v185, %v193
        %v197 = vunpack.c.l.s4 1934713408
        %v198 = vunpack.c.0.s8 %v197
        %v199 = vlaneseq
        %v200 = vshrl.u32 %v199, 7
        %v201 = vsub.s32 %v198, %v200
        %v202 = vrot.slane %v194, %v201
        %v203 = vcombine.high %v202, 0
        %v205 = vunpack.c.l.s4 1934713408
        %v206 = vunpack.c.0.s8 %v205
        %v207 = vlaneseq
        %v208 = vshrl.u32 %v207, 7
        %v209 = vsub.s32 %v206, %v208
        %v210 = vrot.slane %v195, %v209
        %v211 = vcombine.low %v171, %v175
        %v213 = vunpack.c.l.s4 1983009808
        %v214 = vunpack.c.0.s8 %v213
        %v215 = vlaneseq
        %v216 = vshrl.u32 %v215, 7
        %v217 = vsub.s32 %v214, %v216
        %v218 = vrot.slane %v211, %v217
        %v219 = vcombine.low %v173, %v177
        %v221 = vunpack.c.l.s4 1983009808
        %v222 = vunpack.c.0.s8 %v221
        %v223 = vlaneseq
        %v224 = vshrl.u32 %v223, 7
        %v225 = vsub.s32 %v222, %v224
        %v226 = vrot.slane %v219, %v225
        %v227 = vcombine.low %v218, %v226
        %v228 = vcombine.high %v218, %v226
        %v230 = vunpack.c.l.s4 1934713408
        %v231 = vunpack.c.0.s8 %v230
        %v232 = vlaneseq
        %v233 = vshrl.u32 %v232, 7
        %v234 = vsub.s32 %v231, %v233
        %v235 = vrot.slane %v227, %v234
        %v236 = vcombine.high %v235, 0
        %v238 = vunpack.c.l.s4 1934713408
        %v239 = vunpack.c.0.s8 %v238
        %v240 = vlaneseq
        %v241 = vshrl.u32 %v240, 7
        %v242 = vsub.s32 %v239, %v241
        %v243 = vrot.slane %v228, %v242
        %v246 = vpack.i.b16 %v235, %v202
        %v247 = vshrl.u32 %v202, 16
        %v248 = vshrl.u32 %v235, 16
        %v249 = vpack.i.b16 %v248, %v247
        %v252 = vpack.i.b16 %v236, %v203
        %v253 = vshrl.u32 %v203, 16
        %v254 = vshrl.u32 %v236, 16
        %v255 = vpack.i.b16 %v254, %v253
        %v258 = vpack.i.b16 %v243, %v210
        %v259 = vshrl.u32 %v210, 16
        %v260 = vshrl.u32 %v243, 16
        %v261 = vpack.i.b16 %v260, %v259
        %v262 = vunpack.c.l.b16 %v249
        %v263 = vpack.c.b16 %v262, %v262
        %264 = vrot.lane.b32.xlu0 %v263, 10
        %v265 = vpop.permute.xlu0 %264
        %v266 = vunpack.c.l.b16 %v252
        %v267 = vpack.c.b16 %v266, %v266
        %268 = vrot.lane.b32.xlu0 %v267, 20
        %v269 = vpop.permute.xlu0 %268
        %v270 = vunpack.c.l.b16 %v255
        %v271 = vpack.c.b16 %v270, %v270
        %272 = vrot.lane.b32.xlu0 %v271, 30
        %v273 = vpop.permute.xlu0 %272
        %v274 = vunpack.c.l.b16 %v258
        %v275 = vpack.c.b16 %v274, %v274
        %276 = vrot.lane.b32.xlu0 %v275, 40
        %v277 = vpop.permute.xlu0 %276
        %v278 = vunpack.c.l.b16 %v261
        %v279 = vpack.c.b16 %v278, %v278
        %280 = vrot.lane.b32.xlu0 %v279, 50
        %v281 = vpop.permute.xlu0 %280
        %vm282 = vcmask 80896
        %v285 = vsel %vm282, %v246, %v265
        %vm286 = vcmask 162816
        %v288 = vsel %vm286, %v285, %v269
        %vm289 = vcmask 244736
        %v291 = vsel %vm289, %v288, %v273
        %vm292 = vcmask 326656
        %v294 = vsel %vm292, %v291, %v277
        %vm295 = vcmask 408576
        %v297 = vsel %vm295, %v294, %v281
        %v298 = vld [vmem:[%s1] sm:$0x3]
        %v299 = vld [vmem:[%s2] sm:$0xf]
        %301 = vset.pattern.permute.xlu0 0
        %302 = vperm.xlu0 %301, %v299
        %v303 = vpop.permute.xlu0 %302
        %vm305 = vcmask 64512
        %v307 = vsel %vm305, %v298, 0
        %vm309 = vcmask 1043456
        %v310 = vsel %vm309, %v297, 0
        %312 = vmatprep.subr.bf16.mxu0 0
        %313 = vmatpush1.bf16.msra.mxu0 %v310
        %314 = vmatprep.subr.bf16.mxu0 0
        %315 = vmatpush1.bf16.msra.mxu0 0
        %316 = vmatprep.subr.bf16.mxu0 0
        %317 = vmatpush1.bf16.msra.mxu0 0
        %318 = vmatprep.subr.bf16.mxu0 0
        %319 = vmatpush1.bf16.msra.mxu0 0
        %320 = vmatprep.subr.bf16.mxu0 0
        %321 = vmatpush1.bf16.msra.mxu0 0
        %322 = vmatprep.subr.bf16.mxu0 0
        %323 = vmatpush1.bf16.msra.mxu0 0
        %324 = vmatprep.subr.bf16.mxu0 0
        %325 = vmatpush1.bf16.msra.mxu0 0
        %326 = vmatprep.subr.bf16.mxu0 0
        %327 = vmatpush1.bf16.msra.mxu0 0
        %328 = vmatprep.subr.bf16.mxu0 0
        %329 = vmatpush1.bf16.msra.mxu0 0
        %330 = vmatprep.subr.bf16.mxu0 0
        %331 = vmatpush1.bf16.msra.mxu0 0
        %332 = vmatprep.subr.bf16.mxu0 0
        %333 = vmatpush1.bf16.msra.mxu0 0
        %334 = vmatprep.subr.bf16.mxu0 0
        %335 = vmatpush1.bf16.msra.mxu0 0
        %336 = vmatprep.subr.bf16.mxu0 0
        %337 = vmatpush1.bf16.msra.mxu0 0
        %338 = vmatprep.subr.bf16.mxu0 0
        %339 = vmatpush1.bf16.msra.mxu0 0
        %340 = vmatprep.subr.bf16.mxu0 0
        %341 = vmatpush1.bf16.msra.mxu0 0
        %342 = vmatprep.subr.bf16.mxu0 0
        %343 = vmatpush1.bf16.msra.mxu0 0
        %344 = vmatprep.mubr.bf16.mxu0 0
        %345 = vmatmul.mubr.bf16.gmra.mrb[0].mxu0 %v307
        %v346 = vpop.f32.mrb[0].mxu0
        %v347 = vadd.f32 %v303, %v346
        %v348 = vpop.f32.mrb[0].mxu0
        %v349 = vpop.f32.mrb[0].mxu0
        %v350 = vpop.f32.mrb[0].mxu0
        %351 = vdwg.mxu0
        %353 = vrot.lane.b32.xlu0 %v347, 118
        %v354 = vpop.permute.xlu0 %353
        %356 = vrot.lane.b32.xlu0 %v347, 108
        %v357 = vpop.permute.xlu0 %356
        %359 = vrot.lane.b32.xlu0 %v347, 98
        %v360 = vpop.permute.xlu0 %359
        %362 = vrot.lane.b32.xlu0 %v347, 88
        %v363 = vpop.permute.xlu0 %362
        %364 = vrot.lane.b32.xlu0 %v347, 78
        %v365 = vpop.permute.xlu0 %364
        %v366 = vcombine.low %v347, %v357
        %v368 = vunpack.c.l.s4 1983009808
        %v369 = vunpack.c.0.s8 %v368
        %v370 = vlaneseq
        %v371 = vshrl.u32 %v370, 7
        %v372 = vsub.s32 %v369, %v371
        %v373 = vrot.slane %v366, %v372
        %v374 = vcombine.low %v354, %v360
        %v376 = vunpack.c.l.s4 1983009808
        %v377 = vunpack.c.0.s8 %v376
        %v378 = vlaneseq
        %v379 = vshrl.u32 %v378, 7
        %v380 = vsub.s32 %v377, %v379
        %v381 = vrot.slane %v374, %v380
        %v384 = vunpack.c.l.s4 1983009808
        %v385 = vunpack.c.0.s8 %v384
        %v386 = vlaneseq
        %v387 = vshrl.u32 %v386, 7
        %v388 = vsub.s32 %v385, %v387
        %v389 = vrot.slane %v363, %v388
        %v392 = vunpack.c.l.s4 1983009808
        %v393 = vunpack.c.0.s8 %v392
        %v394 = vlaneseq
        %v395 = vshrl.u32 %v394, 7
        %v396 = vsub.s32 %v393, %v395
        %v397 = vrot.slane %v365, %v396
        %v398 = vcombine.low %v373, %v381
        %v399 = vcombine.high %v373, %v381
        %v401 = vunpack.c.l.s4 1934713408
        %v402 = vunpack.c.0.s8 %v401
        %v403 = vlaneseq
        %v404 = vshrl.u32 %v403, 7
        %v405 = vsub.s32 %v402, %v404
        %v406 = vrot.slane %v398, %v405
        %v408 = vunpack.c.l.s4 1934713408
        %v409 = vunpack.c.0.s8 %v408
        %v410 = vlaneseq
        %v411 = vshrl.u32 %v410, 7
        %v412 = vsub.s32 %v409, %v411
        %v413 = vrot.slane %v399, %v412
        %v414 = vcombine.low %v389, %v397
        %v415 = vcombine.high %v389, %v397
        %v417 = vunpack.c.l.s4 1934713408
        %v418 = vunpack.c.0.s8 %v417
        %v419 = vlaneseq
        %v420 = vshrl.u32 %v419, 7
        %v421 = vsub.s32 %v418, %v420
        %v422 = vrot.slane %v414, %v421
        %v424 = vunpack.c.l.s4 1934713408
        %v425 = vunpack.c.0.s8 %v424
        %v426 = vlaneseq
        %v427 = vshrl.u32 %v426, 7
        %v428 = vsub.s32 %v425, %v427
        %v429 = vrot.slane %v415, %v428
        %v430 = vcombine.low %v406, %v422
        %v431 = vcombine.high %v406, %v422
        %v432 = vcombine.low %v413, %v429
        %v433 = vcombine.high %v413, %v429
        %v434 = vmul.f32 %v430, 0.25
        %v435 = vmul.f32 %v431, 0.25
        %v436 = vmul.f32 %v432, 0.25
        %v437 = vmul.f32 %v433, 0.25
        %v438 = vmul.f32 %v430, 0.75
        %v439 = vmul.f32 %v431, 0.75
        %v440 = vmul.f32 %v432, 0.75
        %v441 = vmul.f32 %v433, 0.75
        %v446 = vrot.slane %v438, 1
        %v447 = vrot.slane %v439, 1
        %v448 = vrot.slane %v440, 1
        %v449 = vrot.slane %v441, 1
        %v454 = vadd.f32 %v434, %v446
        %v455 = vadd.f32 %v435, %v447
        %v456 = vadd.f32 %v436, %v448
        %v457 = vadd.f32 %v437, %v449
        %v462 = vrot.slane %v434, 1
        %v463 = vrot.slane %v435, 1
        %v464 = vrot.slane %v436, 1
        %v465 = vrot.slane %v437, 1
        %v470 = vadd.f32 %v438, %v462
        %v471 = vadd.f32 %v439, %v463
        %v472 = vadd.f32 %v440, %v464
        %v473 = vadd.f32 %v441, %v465
        %v474 = vmul.f32 %v454, 0.25
        %v475 = vmul.f32 %v455, 0.25
        %v476 = vmul.f32 %v456, 0.25
        %v477 = vmul.f32 %v457, 0.25
        %v478 = vmul.f32 %v454, 0.75
        %v479 = vmul.f32 %v455, 0.75
        %v480 = vmul.f32 %v456, 0.75
        %v481 = vmul.f32 %v457, 0.75
        %486 = vrot.lane.b32.xlu0 %v478, 127
        %v487 = vpop.permute.xlu0 %486
        %488 = vrot.lane.b32.xlu0 %v479, 127
        %v489 = vpop.permute.xlu0 %488
        %490 = vrot.lane.b32.xlu0 %v480, 127
        %v491 = vpop.permute.xlu0 %490
        %492 = vrot.lane.b32.xlu0 %v481, 127
        %v493 = vpop.permute.xlu0 %492
        %502 = vrot.lane.b32.xlu0 %v474, 127
        %v503 = vpop.permute.xlu0 %502
        %504 = vrot.lane.b32.xlu0 %v475, 127
        %v505 = vpop.permute.xlu0 %504
        %506 = vrot.lane.b32.xlu0 %v476, 127
        %v507 = vpop.permute.xlu0 %506
        %508 = vrot.lane.b32.xlu0 %v477, 127
        %v509 = vpop.permute.xlu0 %508
        %v514 = vadd.f32 %v478, %v503
        %v515 = vadd.f32 %v479, %v505
        %v516 = vadd.f32 %v480, %v507
        %v517 = vadd.f32 %v481, %v509
        %v518 = vadd.f32 %v474, %v487
        %v520 = vunpack.c.l.s4 1983009808
        %v521 = vunpack.c.0.s8 %v520
        %v522 = vlaneseq
        %v523 = vshrl.u32 %v522, 7
        %v524 = vsub.s32 %v521, %v523
        %v525 = vrot.slane %v518, %v524
        %v526 = vcombine.high %v525, 0.0
        %v528 = vunpack.c.l.s4 1934713408
        %v529 = vunpack.c.0.s8 %v528
        %v530 = vlaneseq
        %v531 = vshrl.u32 %v530, 7
        %v532 = vsub.s32 %v529, %v531
        %v533 = vrot.slane %v525, %v532
        %v535 = vunpack.c.l.s4 1934713408
        %v536 = vunpack.c.0.s8 %v535
        %v537 = vlaneseq
        %v538 = vshrl.u32 %v537, 7
        %v539 = vsub.s32 %v536, %v538
        %v540 = vrot.slane %v526, %v539
        %v541 = vcombine.high %v533, 0.0
        %v542 = vcombine.high %v540, 0.0
        %v543 = vadd.f32 %v475, %v489
        %v545 = vunpack.c.l.s4 1983009808
        %v546 = vunpack.c.0.s8 %v545
        %v547 = vlaneseq
        %v548 = vshrl.u32 %v547, 7
        %v549 = vsub.s32 %v546, %v548
        %v550 = vrot.slane %v543, %v549
        %v551 = vcombine.high %v550, 0.0
        %v553 = vunpack.c.l.s4 1934713408
        %v554 = vunpack.c.0.s8 %v553
        %v555 = vlaneseq
        %v556 = vshrl.u32 %v555, 7
        %v557 = vsub.s32 %v554, %v556
        %v558 = vrot.slane %v550, %v557
        %v560 = vunpack.c.l.s4 1934713408
        %v561 = vunpack.c.0.s8 %v560
        %v562 = vlaneseq
        %v563 = vshrl.u32 %v562, 7
        %v564 = vsub.s32 %v561, %v563
        %v565 = vrot.slane %v551, %v564
        %v566 = vcombine.high %v558, 0.0
        %v567 = vcombine.high %v565, 0.0
        %v568 = vadd.f32 %v476, %v491
        %v570 = vunpack.c.l.s4 1983009808
        %v571 = vunpack.c.0.s8 %v570
        %v572 = vlaneseq
        %v573 = vshrl.u32 %v572, 7
        %v574 = vsub.s32 %v571, %v573
        %v575 = vrot.slane %v568, %v574
        %v576 = vcombine.high %v575, 0.0
        %v578 = vunpack.c.l.s4 1934713408
        %v579 = vunpack.c.0.s8 %v578
        %v580 = vlaneseq
        %v581 = vshrl.u32 %v580, 7
        %v582 = vsub.s32 %v579, %v581
        %v583 = vrot.slane %v575, %v582
        %v585 = vunpack.c.l.s4 1934713408
        %v586 = vunpack.c.0.s8 %v585
        %v587 = vlaneseq
        %v588 = vshrl.u32 %v587, 7
        %v589 = vsub.s32 %v586, %v588
        %v590 = vrot.slane %v576, %v589
        %v591 = vcombine.high %v583, 0.0
        %v592 = vcombine.high %v590, 0.0
        %v593 = vadd.f32 %v477, %v493
        %v595 = vunpack.c.l.s4 1983009808
        %v596 = vunpack.c.0.s8 %v595
        %v597 = vlaneseq
        %v598 = vshrl.u32 %v597, 7
        %v599 = vsub.s32 %v596, %v598
        %v600 = vrot.slane %v593, %v599
        %v601 = vcombine.high %v600, 0.0
        %v603 = vunpack.c.l.s4 1934713408
        %v604 = vunpack.c.0.s8 %v603
        %v605 = vlaneseq
        %v606 = vshrl.u32 %v605, 7
        %v607 = vsub.s32 %v604, %v606
        %v608 = vrot.slane %v600, %v607
        %v610 = vunpack.c.l.s4 1934713408
        %v611 = vunpack.c.0.s8 %v610
        %v612 = vlaneseq
        %v613 = vshrl.u32 %v612, 7
        %v614 = vsub.s32 %v611, %v613
        %v615 = vrot.slane %v601, %v614
        %v616 = vcombine.high %v608, 0.0
        %v617 = vcombine.high %v615, 0.0
        %622 = vrot.lane.b32.xlu0 %v541, 8
        %v623 = vpop.permute.xlu0 %622
        %624 = vrot.lane.b32.xlu0 %v566, 8
        %v625 = vpop.permute.xlu0 %624
        %626 = vrot.lane.b32.xlu0 %v591, 8
        %v627 = vpop.permute.xlu0 %626
        %628 = vrot.lane.b32.xlu0 %v616, 8
        %v629 = vpop.permute.xlu0 %628
        %638 = vrot.lane.b32.xlu0 %v540, 16
        %v639 = vpop.permute.xlu0 %638
        %640 = vrot.lane.b32.xlu0 %v565, 16
        %v641 = vpop.permute.xlu0 %640
        %642 = vrot.lane.b32.xlu0 %v590, 16
        %v643 = vpop.permute.xlu0 %642
        %644 = vrot.lane.b32.xlu0 %v615, 16
        %v645 = vpop.permute.xlu0 %644
        %654 = vrot.lane.b32.xlu0 %v542, 24
        %v655 = vpop.permute.xlu0 %654
        %656 = vrot.lane.b32.xlu0 %v567, 24
        %v657 = vpop.permute.xlu0 %656
        %658 = vrot.lane.b32.xlu0 %v592, 24
        %v659 = vpop.permute.xlu0 %658
        %660 = vrot.lane.b32.xlu0 %v617, 24
        %v661 = vpop.permute.xlu0 %660
        %v666 = vsel %vm305, %v533, %v623
        %v667 = vsel %vm305, %v558, %v625
        %v668 = vsel %vm305, %v583, %v627
        %v669 = vsel %vm305, %v608, %v629
        %vm670 = vcmask 130048
        %v671 = vsel %vm670, %v666, %v639
        %v672 = vsel %vm670, %v667, %v641
        %v673 = vsel %vm670, %v668, %v643
        %v674 = vsel %vm670, %v669, %v645
        %vm675 = vcmask 195584
        %v676 = vsel %vm675, %v671, %v655
        %v677 = vsel %vm675, %v672, %v657
        %v678 = vsel %vm675, %v673, %v659
        %v679 = vsel %vm675, %v674, %v661
        %vm680 = vcmask 253952
        %681 = vst.msk [vmem:[%s163] sm:$0x1] %vm680, %v676
        %682 = vst.msk [vmem:[%s163 + $0x4] sm:$0x1] %vm680, %v677
        %683 = vst.msk [vmem:[%s163 + $0x8] sm:$0x1] %vm680, %v678
        %684 = vst.msk [vmem:[%s163 + $0xc] sm:$0x1] %vm680, %v679
        %689 = vrot.lane.b32.xlu0 %v514, 127
        %v690 = vpop.permute.xlu0 %689
        %691 = vrot.lane.b32.xlu0 %v515, 127
        %v692 = vpop.permute.xlu0 %691
        %693 = vrot.lane.b32.xlu0 %v516, 127
        %v694 = vpop.permute.xlu0 %693
        %695 = vrot.lane.b32.xlu0 %v517, 127
        %v696 = vpop.permute.xlu0 %695
        %v699 = vunpack.c.l.s4 1983009808
        %v700 = vunpack.c.0.s8 %v699
        %v701 = vlaneseq
        %v702 = vshrl.u32 %v701, 7
        %v703 = vsub.s32 %v700, %v702
        %v704 = vrot.slane %v690, %v703
        %v705 = vcombine.high %v704, 0.0
        %v707 = vunpack.c.l.s4 1934713408
        %v708 = vunpack.c.0.s8 %v707
        %v709 = vlaneseq
        %v710 = vshrl.u32 %v709, 7
        %v711 = vsub.s32 %v708, %v710
        %v712 = vrot.slane %v704, %v711
        %v714 = vunpack.c.l.s4 1934713408
        %v715 = vunpack.c.0.s8 %v714
        %v716 = vlaneseq
        %v717 = vshrl.u32 %v716, 7
        %v718 = vsub.s32 %v715, %v717
        %v719 = vrot.slane %v705, %v718
        %v720 = vcombine.high %v712, 0.0
        %v721 = vcombine.high %v719, 0.0
        %v724 = vunpack.c.l.s4 1983009808
        %v725 = vunpack.c.0.s8 %v724
        %v726 = vlaneseq
        %v727 = vshrl.u32 %v726, 7
        %v728 = vsub.s32 %v725, %v727
        %v729 = vrot.slane %v692, %v728
        %v730 = vcombine.high %v729, 0.0
        %v732 = vunpack.c.l.s4 1934713408
        %v733 = vunpack.c.0.s8 %v732
        %v734 = vlaneseq
        %v735 = vshrl.u32 %v734, 7
        %v736 = vsub.s32 %v733, %v735
        %v737 = vrot.slane %v729, %v736
        %v739 = vunpack.c.l.s4 1934713408
        %v740 = vunpack.c.0.s8 %v739
        %v741 = vlaneseq
        %v742 = vshrl.u32 %v741, 7
        %v743 = vsub.s32 %v740, %v742
        %v744 = vrot.slane %v730, %v743
        %v745 = vcombine.high %v737, 0.0
        %v746 = vcombine.high %v744, 0.0
        %v749 = vunpack.c.l.s4 1983009808
        %v750 = vunpack.c.0.s8 %v749
        %v751 = vlaneseq
        %v752 = vshrl.u32 %v751, 7
        %v753 = vsub.s32 %v750, %v752
        %v754 = vrot.slane %v694, %v753
        %v755 = vcombine.high %v754, 0.0
        %v757 = vunpack.c.l.s4 1934713408
        %v758 = vunpack.c.0.s8 %v757
        %v759 = vlaneseq
        %v760 = vshrl.u32 %v759, 7
        %v761 = vsub.s32 %v758, %v760
        %v762 = vrot.slane %v754, %v761
        %v764 = vunpack.c.l.s4 1934713408
        %v765 = vunpack.c.0.s8 %v764
        %v766 = vlaneseq
        %v767 = vshrl.u32 %v766, 7
        %v768 = vsub.s32 %v765, %v767
        %v769 = vrot.slane %v755, %v768
        %v770 = vcombine.high %v762, 0.0
        %v771 = vcombine.high %v769, 0.0
        %v774 = vunpack.c.l.s4 1983009808
        %v775 = vunpack.c.0.s8 %v774
        %v776 = vlaneseq
        %v777 = vshrl.u32 %v776, 7
        %v778 = vsub.s32 %v775, %v777
        %v779 = vrot.slane %v696, %v778
        %v780 = vcombine.high %v779, 0.0
        %v782 = vunpack.c.l.s4 1934713408
        %v783 = vunpack.c.0.s8 %v782
        %v784 = vlaneseq
        %v785 = vshrl.u32 %v784, 7
        %v786 = vsub.s32 %v783, %v785
        %v787 = vrot.slane %v779, %v786
        %v789 = vunpack.c.l.s4 1934713408
        %v790 = vunpack.c.0.s8 %v789
        %v791 = vlaneseq
        %v792 = vshrl.u32 %v791, 7
        %v793 = vsub.s32 %v790, %v792
        %v794 = vrot.slane %v780, %v793
        %v795 = vcombine.high %v787, 0.0
        %v796 = vcombine.high %v794, 0.0
        %801 = vrot.lane.b32.xlu0 %v720, 8
        %v802 = vpop.permute.xlu0 %801
        %803 = vrot.lane.b32.xlu0 %v745, 8
        %v804 = vpop.permute.xlu0 %803
        %805 = vrot.lane.b32.xlu0 %v770, 8
        %v806 = vpop.permute.xlu0 %805
        %807 = vrot.lane.b32.xlu0 %v795, 8
        %v808 = vpop.permute.xlu0 %807
        %817 = vrot.lane.b32.xlu0 %v719, 16
        %v818 = vpop.permute.xlu0 %817
        %819 = vrot.lane.b32.xlu0 %v744, 16
        %v820 = vpop.permute.xlu0 %819
        %821 = vrot.lane.b32.xlu0 %v769, 16
        %v822 = vpop.permute.xlu0 %821
        %823 = vrot.lane.b32.xlu0 %v794, 16
        %v824 = vpop.permute.xlu0 %823
        %833 = vrot.lane.b32.xlu0 %v721, 24
        %v834 = vpop.permute.xlu0 %833
        %835 = vrot.lane.b32.xlu0 %v746, 24
        %v836 = vpop.permute.xlu0 %835
        %837 = vrot.lane.b32.xlu0 %v771, 24
        %v838 = vpop.permute.xlu0 %837
        %839 = vrot.lane.b32.xlu0 %v796, 24
        %v840 = vpop.permute.xlu0 %839
        %v845 = vsel %vm305, %v712, %v802
        %v846 = vsel %vm305, %v737, %v804
        %v847 = vsel %vm305, %v762, %v806
        %v848 = vsel %vm305, %v787, %v808
        %v849 = vsel %vm670, %v845, %v818
        %v850 = vsel %vm670, %v846, %v820
        %v851 = vsel %vm670, %v847, %v822
        %v852 = vsel %vm670, %v848, %v824
        %v853 = vsel %vm675, %v849, %v834
        %v854 = vsel %vm675, %v850, %v836
        %v855 = vsel %vm675, %v851, %v838
        %v856 = vsel %vm675, %v852, %v840
        %857 = vst.msk [vmem:[%s163 + $0x1] sm:$0x1] %vm680, %v853
        %858 = vst.msk [vmem:[%s163 + $0x5] sm:$0x1] %vm680, %v854
        %859 = vst.msk [vmem:[%s163 + $0x9] sm:$0x1] %vm680, %v855
        %860 = vst.msk [vmem:[%s163 + $0xd] sm:$0x1] %vm680, %v856
        %v861 = vmul.f32 %v470, 0.25
        %v862 = vmul.f32 %v471, 0.25
        %v863 = vmul.f32 %v472, 0.25
        %v864 = vmul.f32 %v473, 0.25
        %v865 = vmul.f32 %v470, 0.75
        %v866 = vmul.f32 %v471, 0.75
        %v867 = vmul.f32 %v472, 0.75
        %v868 = vmul.f32 %v473, 0.75
        %873 = vrot.lane.b32.xlu0 %v865, 127
        %v874 = vpop.permute.xlu0 %873
        %875 = vrot.lane.b32.xlu0 %v866, 127
        %v876 = vpop.permute.xlu0 %875
        %877 = vrot.lane.b32.xlu0 %v867, 127
        %v878 = vpop.permute.xlu0 %877
        %879 = vrot.lane.b32.xlu0 %v868, 127
        %v880 = vpop.permute.xlu0 %879
        %v885 = vadd.f32 %v861, %v874
        %v886 = vadd.f32 %v862, %v876
        %v887 = vadd.f32 %v863, %v878
        %v888 = vadd.f32 %v864, %v880
        %893 = vrot.lane.b32.xlu0 %v861, 127
        %v894 = vpop.permute.xlu0 %893
        %895 = vrot.lane.b32.xlu0 %v862, 127
        %v896 = vpop.permute.xlu0 %895
        %897 = vrot.lane.b32.xlu0 %v863, 127
        %v898 = vpop.permute.xlu0 %897
        %899 = vrot.lane.b32.xlu0 %v864, 127
        %v900 = vpop.permute.xlu0 %899
        %v905 = vadd.f32 %v865, %v894
        %v906 = vadd.f32 %v866, %v896
        %v907 = vadd.f32 %v867, %v898
        %v908 = vadd.f32 %v868, %v900
        %v913 = vrot.slane %v885, 1
        %v914 = vrot.slane %v886, 1
        %v915 = vrot.slane %v887, 1
        %v916 = vrot.slane %v888, 1
        %v919 = vunpack.c.l.s4 1983009808
        %v920 = vunpack.c.0.s8 %v919
        %v921 = vlaneseq
        %v922 = vshrl.u32 %v921, 7
        %v923 = vsub.s32 %v920, %v922
        %v924 = vrot.slane %v913, %v923
        %v925 = vcombine.high %v924, 0.0
        %v927 = vunpack.c.l.s4 1934713408
        %v928 = vunpack.c.0.s8 %v927
        %v929 = vlaneseq
        %v930 = vshrl.u32 %v929, 7
        %v931 = vsub.s32 %v928, %v930
        %v932 = vrot.slane %v924, %v931
        %v934 = vunpack.c.l.s4 1934713408
        %v935 = vunpack.c.0.s8 %v934
        %v936 = vlaneseq
        %v937 = vshrl.u32 %v936, 7
        %v938 = vsub.s32 %v935, %v937
        %v939 = vrot.slane %v925, %v938
        %v940 = vcombine.high %v932, 0.0
        %v941 = vcombine.high %v939, 0.0
        %v944 = vunpack.c.l.s4 1983009808
        %v945 = vunpack.c.0.s8 %v944
        %v946 = vlaneseq
        %v947 = vshrl.u32 %v946, 7
        %v948 = vsub.s32 %v945, %v947
        %v949 = vrot.slane %v914, %v948
        %v950 = vcombine.high %v949, 0.0
        %v952 = vunpack.c.l.s4 1934713408
        %v953 = vunpack.c.0.s8 %v952
        %v954 = vlaneseq
        %v955 = vshrl.u32 %v954, 7
        %v956 = vsub.s32 %v953, %v955
        %v957 = vrot.slane %v949, %v956
        %v959 = vunpack.c.l.s4 1934713408
        %v960 = vunpack.c.0.s8 %v959
        %v961 = vlaneseq
        %v962 = vshrl.u32 %v961, 7
        %v963 = vsub.s32 %v960, %v962
        %v964 = vrot.slane %v950, %v963
        %v965 = vcombine.high %v957, 0.0
        %v966 = vcombine.high %v964, 0.0
        %v969 = vunpack.c.l.s4 1983009808
        %v970 = vunpack.c.0.s8 %v969
        %v971 = vlaneseq
        %v972 = vshrl.u32 %v971, 7
        %v973 = vsub.s32 %v970, %v972
        %v974 = vrot.slane %v915, %v973
        %v975 = vcombine.high %v974, 0.0
        %v977 = vunpack.c.l.s4 1934713408
        %v978 = vunpack.c.0.s8 %v977
        %v979 = vlaneseq
        %v980 = vshrl.u32 %v979, 7
        %v981 = vsub.s32 %v978, %v980
        %v982 = vrot.slane %v974, %v981
        %v984 = vunpack.c.l.s4 1934713408
        %v985 = vunpack.c.0.s8 %v984
        %v986 = vlaneseq
        %v987 = vshrl.u32 %v986, 7
        %v988 = vsub.s32 %v985, %v987
        %v989 = vrot.slane %v975, %v988
        %v990 = vcombine.high %v982, 0.0
        %v991 = vcombine.high %v989, 0.0
        %v994 = vunpack.c.l.s4 1983009808
        %v995 = vunpack.c.0.s8 %v994
        %v996 = vlaneseq
        %v997 = vshrl.u32 %v996, 7
        %v998 = vsub.s32 %v995, %v997
        %v999 = vrot.slane %v916, %v998
        %v1000 = vcombine.high %v999, 0.0
        %v1002 = vunpack.c.l.s4 1934713408
        %v1003 = vunpack.c.0.s8 %v1002
        %v1004 = vlaneseq
        %v1005 = vshrl.u32 %v1004, 7
        %v1006 = vsub.s32 %v1003, %v1005
        %v1007 = vrot.slane %v999, %v1006
        %v1009 = vunpack.c.l.s4 1934713408
        %v1010 = vunpack.c.0.s8 %v1009
        %v1011 = vlaneseq
        %v1012 = vshrl.u32 %v1011, 7
        %v1013 = vsub.s32 %v1010, %v1012
        %v1014 = vrot.slane %v1000, %v1013
        %v1015 = vcombine.high %v1007, 0.0
        %v1016 = vcombine.high %v1014, 0.0
        %1021 = vrot.lane.b32.xlu0 %v940, 8
        %v1022 = vpop.permute.xlu0 %1021
        %1023 = vrot.lane.b32.xlu0 %v965, 8
        %v1024 = vpop.permute.xlu0 %1023
        %1025 = vrot.lane.b32.xlu0 %v990, 8
        %v1026 = vpop.permute.xlu0 %1025
        %1027 = vrot.lane.b32.xlu0 %v1015, 8
        %v1028 = vpop.permute.xlu0 %1027
        %1037 = vrot.lane.b32.xlu0 %v939, 16
        %v1038 = vpop.permute.xlu0 %1037
        %1039 = vrot.lane.b32.xlu0 %v964, 16
        %v1040 = vpop.permute.xlu0 %1039
        %1041 = vrot.lane.b32.xlu0 %v989, 16
        %v1042 = vpop.permute.xlu0 %1041
        %1043 = vrot.lane.b32.xlu0 %v1014, 16
        %v1044 = vpop.permute.xlu0 %1043
        %1053 = vrot.lane.b32.xlu0 %v941, 24
        %v1054 = vpop.permute.xlu0 %1053
        %1055 = vrot.lane.b32.xlu0 %v966, 24
        %v1056 = vpop.permute.xlu0 %1055
        %1057 = vrot.lane.b32.xlu0 %v991, 24
        %v1058 = vpop.permute.xlu0 %1057
        %1059 = vrot.lane.b32.xlu0 %v1016, 24
        %v1060 = vpop.permute.xlu0 %1059
        %v1065 = vsel %vm305, %v932, %v1022
        %v1066 = vsel %vm305, %v957, %v1024
        %v1067 = vsel %vm305, %v982, %v1026
        %v1068 = vsel %vm305, %v1007, %v1028
        %v1069 = vsel %vm670, %v1065, %v1038
        %v1070 = vsel %vm670, %v1066, %v1040
        %v1071 = vsel %vm670, %v1067, %v1042
        %v1072 = vsel %vm670, %v1068, %v1044
        %v1073 = vsel %vm675, %v1069, %v1054
        %v1074 = vsel %vm675, %v1070, %v1056
        %v1075 = vsel %vm675, %v1071, %v1058
        %v1076 = vsel %vm675, %v1072, %v1060
        %1077 = vst.msk [vmem:[%s163 + $0x2] sm:$0x1] %vm680, %v1073
        %1078 = vst.msk [vmem:[%s163 + $0x6] sm:$0x1] %vm680, %v1074
        %1079 = vst.msk [vmem:[%s163 + $0xa] sm:$0x1] %vm680, %v1075
        %1080 = vst.msk [vmem:[%s163 + $0xe] sm:$0x1] %vm680, %v1076
        %v1085 = vrot.slane %v905, 1
        %v1086 = vrot.slane %v906, 1
        %v1087 = vrot.slane %v907, 1
        %v1088 = vrot.slane %v908, 1
        %1089 = vrot.lane.b32.xlu0 %v1085, 127
        %v1090 = vpop.permute.xlu0 %1089
        %1091 = vrot.lane.b32.xlu0 %v1086, 127
        %v1092 = vpop.permute.xlu0 %1091
        %1093 = vrot.lane.b32.xlu0 %v1087, 127
        %v1094 = vpop.permute.xlu0 %1093
        %1095 = vrot.lane.b32.xlu0 %v1088, 127
        %v1096 = vpop.permute.xlu0 %1095
        %v1099 = vunpack.c.l.s4 1983009808
        %v1100 = vunpack.c.0.s8 %v1099
        %v1101 = vlaneseq
        %v1102 = vshrl.u32 %v1101, 7
        %v1103 = vsub.s32 %v1100, %v1102
        %v1104 = vrot.slane %v1090, %v1103
        %v1105 = vcombine.high %v1104, 0.0
        %v1107 = vunpack.c.l.s4 1934713408
        %v1108 = vunpack.c.0.s8 %v1107
        %v1109 = vlaneseq
        %v1110 = vshrl.u32 %v1109, 7
        %v1111 = vsub.s32 %v1108, %v1110
        %v1112 = vrot.slane %v1104, %v1111
        %v1114 = vunpack.c.l.s4 1934713408
        %v1115 = vunpack.c.0.s8 %v1114
        %v1116 = vlaneseq
        %v1117 = vshrl.u32 %v1116, 7
        %v1118 = vsub.s32 %v1115, %v1117
        %v1119 = vrot.slane %v1105, %v1118
        %v1120 = vcombine.high %v1112, 0.0
        %v1121 = vcombine.high %v1119, 0.0
        %v1124 = vunpack.c.l.s4 1983009808
        %v1125 = vunpack.c.0.s8 %v1124
        %v1126 = vlaneseq
        %v1127 = vshrl.u32 %v1126, 7
        %v1128 = vsub.s32 %v1125, %v1127
        %v1129 = vrot.slane %v1092, %v1128
        %v1130 = vcombine.high %v1129, 0.0
        %v1132 = vunpack.c.l.s4 1934713408
        %v1133 = vunpack.c.0.s8 %v1132
        %v1134 = vlaneseq
        %v1135 = vshrl.u32 %v1134, 7
        %v1136 = vsub.s32 %v1133, %v1135
        %v1137 = vrot.slane %v1129, %v1136
        %v1139 = vunpack.c.l.s4 1934713408
        %v1140 = vunpack.c.0.s8 %v1139
        %v1141 = vlaneseq
        %v1142 = vshrl.u32 %v1141, 7
        %v1143 = vsub.s32 %v1140, %v1142
        %v1144 = vrot.slane %v1130, %v1143
        %v1145 = vcombine.high %v1137, 0.0
        %v1146 = vcombine.high %v1144, 0.0
        %v1149 = vunpack.c.l.s4 1983009808
        %v1150 = vunpack.c.0.s8 %v1149
        %v1151 = vlaneseq
        %v1152 = vshrl.u32 %v1151, 7
        %v1153 = vsub.s32 %v1150, %v1152
        %v1154 = vrot.slane %v1094, %v1153
        %v1155 = vcombine.high %v1154, 0.0
        %v1157 = vunpack.c.l.s4 1934713408
        %v1158 = vunpack.c.0.s8 %v1157
        %v1159 = vlaneseq
        %v1160 = vshrl.u32 %v1159, 7
        %v1161 = vsub.s32 %v1158, %v1160
        %v1162 = vrot.slane %v1154, %v1161
        %v1164 = vunpack.c.l.s4 1934713408
        %v1165 = vunpack.c.0.s8 %v1164
        %v1166 = vlaneseq
        %v1167 = vshrl.u32 %v1166, 7
        %v1168 = vsub.s32 %v1165, %v1167
        %v1169 = vrot.slane %v1155, %v1168
        %v1170 = vcombine.high %v1162, 0.0
        %v1171 = vcombine.high %v1169, 0.0
        %v1174 = vunpack.c.l.s4 1983009808
        %v1175 = vunpack.c.0.s8 %v1174
        %v1176 = vlaneseq
        %v1177 = vshrl.u32 %v1176, 7
        %v1178 = vsub.s32 %v1175, %v1177
        %v1179 = vrot.slane %v1096, %v1178
        %v1180 = vcombine.high %v1179, 0.0
        %v1182 = vunpack.c.l.s4 1934713408
        %v1183 = vunpack.c.0.s8 %v1182
        %v1184 = vlaneseq
        %v1185 = vshrl.u32 %v1184, 7
        %v1186 = vsub.s32 %v1183, %v1185
        %v1187 = vrot.slane %v1179, %v1186
        %v1189 = vunpack.c.l.s4 1934713408
        %v1190 = vunpack.c.0.s8 %v1189
        %v1191 = vlaneseq
        %v1192 = vshrl.u32 %v1191, 7
        %v1193 = vsub.s32 %v1190, %v1192
        %v1194 = vrot.slane %v1180, %v1193
        %v1195 = vcombine.high %v1187, 0.0
        %v1196 = vcombine.high %v1194, 0.0
        %1201 = vrot.lane.b32.xlu0 %v1120, 8
        %v1202 = vpop.permute.xlu0 %1201
        %1203 = vrot.lane.b32.xlu0 %v1145, 8
        %v1204 = vpop.permute.xlu0 %1203
        %1205 = vrot.lane.b32.xlu0 %v1170, 8
        %v1206 = vpop.permute.xlu0 %1205
        %1207 = vrot.lane.b32.xlu0 %v1195, 8
        %v1208 = vpop.permute.xlu0 %1207
        %1217 = vrot.lane.b32.xlu0 %v1119, 16
        %v1218 = vpop.permute.xlu0 %1217
        %1219 = vrot.lane.b32.xlu0 %v1144, 16
        %v1220 = vpop.permute.xlu0 %1219
        %1221 = vrot.lane.b32.xlu0 %v1169, 16
        %v1222 = vpop.permute.xlu0 %1221
        %1223 = vrot.lane.b32.xlu0 %v1194, 16
        %v1224 = vpop.permute.xlu0 %1223
        %1233 = vrot.lane.b32.xlu0 %v1121, 24
        %v1234 = vpop.permute.xlu0 %1233
        %1235 = vrot.lane.b32.xlu0 %v1146, 24
        %v1236 = vpop.permute.xlu0 %1235
        %1237 = vrot.lane.b32.xlu0 %v1171, 24
        %v1238 = vpop.permute.xlu0 %1237
        %1239 = vrot.lane.b32.xlu0 %v1196, 24
        %v1240 = vpop.permute.xlu0 %1239
        %v1245 = vsel %vm305, %v1112, %v1202
        %v1246 = vsel %vm305, %v1137, %v1204
        %v1247 = vsel %vm305, %v1162, %v1206
        %v1248 = vsel %vm305, %v1187, %v1208
        %v1249 = vsel %vm670, %v1245, %v1218
        %v1250 = vsel %vm670, %v1246, %v1220
        %v1251 = vsel %vm670, %v1247, %v1222
        %v1252 = vsel %vm670, %v1248, %v1224
        %v1253 = vsel %vm675, %v1249, %v1234
        %v1254 = vsel %vm675, %v1250, %v1236
        %v1255 = vsel %vm675, %v1251, %v1238
        %v1256 = vsel %vm675, %v1252, %v1240
        %1257 = vst.msk [vmem:[%s163 + $0x3] sm:$0x1] %vm680, %v1253
        %1258 = vst.msk [vmem:[%s163 + $0x7] sm:$0x1] %vm680, %v1254
        %1259 = vst.msk [vmem:[%s163 + $0xb] sm:$0x1] %vm680, %v1255
        %1260 = vst.msk [vmem:[%s163 + $0xf] sm:$0x1] %vm680, %v1256
        %s1261 = sand.u32 %s93, 1
        %s1262 = scalar_lea.sflag [#allocation3], %s1261
        %s1263 = sand.u32 %s93, 1
        %s1264 = smul.addr %s1263, 16
        %s1265 = scalar_lea.vmem [#allocation2], %s1264
        // Predicated region
        $region33: #{tpu_custom_call.1} parent=31 // pred_check
          %p1266 = pneg %p103
        $region34: #{tpu_custom_call.1} parent=31 // pred_check_branch
          %1268 = sbr.rel (%p1266) target = $region36
        $region35: #{tpu_custom_call.1} parent=31 // pred_region
          %s1270 = ssub.s32 256, 256
          %1271 = vsyncadd %s1262, %s1270
          %s1272 = smul.addr %s17, 4
          %s1273 = smul.addr %s1272, 64
          %s1274 = scalar_lea.hbm %s3, %s1273
          %s1275 = sshll.u32 %s1265, 4
          %s1276 = int_to_ptr.vmem [resolvable:$true] %s1275
          %1281 = dma.vmem_to_hbm [thread:$0]  %s1276, 256, %s1274, %s1262, 64, 64, 4
        $region36: #{tpu_custom_call.1} parent=31 // pred_fallthru
          _
      $region32: #{tpu_custom_call.1} parent=5 // pred_fallthru
        _
      %p1282 = scmp.le.s32.totalorder 2, %s12
      // Predicated region
      $region37: #{tpu_custom_call.1} parent=5 // pred_check
        %p1283 = pneg %p1282
      $region38: #{tpu_custom_call.1} parent=5 // pred_check_branch
        %1285 = sbr.rel (%p1283) target = $region40
      $region39: #{tpu_custom_call.1} parent=5 // pred_region
        %s1286 = ssub.s32 %s12, 2
        // Predicated region
        $region41: #{tpu_custom_call.1} parent=39 // pred_check
          %p1287 = pneg %p109
        $region42: #{tpu_custom_call.1} parent=39 // pred_check_branch
          %1289 = sbr.rel (%p1287) target = $region44
        $region43: #{tpu_custom_call.1} parent=39 // pred_region
          %s1290 = sand.u32 %s94, 1
          %s1291 = scalar_lea.sflag [#allocation3], %s1290
          %s1292 = sand.u32 %s94, 1
          %s1293 = smul.addr %s1292, 16
          %s1294 = scalar_lea.vmem [#allocation2], %s1293
          %1295 = dma.done %s1291, 256
        $region44: #{tpu_custom_call.1} parent=39 // pred_fallthru
          _
      $region40: #{tpu_custom_call.1} parent=5 // pred_fallthru
        _
    $region6: #{tpu_custom_call.1} parent=1 // loop_footer
      %s16 = sadd.s32 1, %s12
    $region7: #{tpu_custom_call.1} parent=1 // loop_footer_branch
      %11 = sbr.rel target = $region3
    $region8: #{tpu_custom_call.1} parent=1 // loop_exit
      _
    %1296 = vsyncpa [#allocation3], 1
    %s1297 = scalar_lea.sflag [#allocation3], 1
    %1298 = vsyncpa %s1297, 1

</llo_original>
